<compile_context>
chip_gen: v7x
topology: tpu7x:2x2x1
jax: 0.10.0
libtpu: 0.0.40
codegen_flags: <defaults>
</compile_context>

<pallas_src>
import jax
import jax.numpy as jnp
from jax.experimental import pallas as pl
from jax.experimental.pallas import tpu as pltpu

# ---- model hyper-parameters (small, consistent with the module) ----
N_BLOCKS = 3
HIDDEN = 32                          # hidden_neurons
MULT = 2                             # expansion factor inside each residual branch
EXPANDED = HIDDEN * MULT             # 64
IN_FEATURES = 3                      # DenseResBackbone first Linear is Linear(3, hidden)
LN_EPS = 1e-5                        # torch.nn.LayerNorm default eps
BATCH = 16

SLAB_W = max(HIDDEN, EXPANDED)             # 64-lane packed parameter slab
MAT_ROWS_PER_BLOCK = HIDDEN + EXPANDED     # 96 rows per block (8-sublane aligned)
MAT_ROWS = N_BLOCKS * MAT_ROWS_PER_BLOCK   # 288
VEC_HEAD = MAT_ROWS                        # head vectors: win rows 0..2, bin row 3
VEC_BLOCK0 = VEC_HEAD + 8                  # per-block vectors, 8 rows per block
SLAB_ROWS = VEC_BLOCK0 + 8 * N_BLOCKS      # 320 rows total


def _backbone_kernel(x_ref, p_ref, out_ref):
    x = x_ref[...]                                              # (TB, 3)

    # ---- input projection Linear(3, H): 3 VPU FMAs (K=3 too small for the MXU)
    h = p_ref[VEC_HEAD + IN_FEATURES:VEC_HEAD + IN_FEATURES + 1, :HIDDEN]   # bias (1, H)
    for c in range(IN_FEATURES):
        h = h + x[:, c:c + 1] * p_ref[VEC_HEAD + c:VEC_HEAD + c + 1, :HIDDEN]

    # ---- n_blocks x DenseResidualLayer (static unroll; slab slices are 8-aligned views)
    for k in range(N_BLOCKS):
        mrow = k * MAT_ROWS_PER_BLOCK
        w1 = p_ref[mrow:mrow + HIDDEN, :]                                   # (H, M)
        w2 = p_ref[mrow + HIDDEN:mrow + MAT_ROWS_PER_BLOCK, :HIDDEN]        # (M, H)

        vrow = VEC_BLOCK0 + 8 * k
        ln_w = p_ref[vrow + 0:vrow + 1, :HIDDEN]                # (1, H)
        ln_b = p_ref[vrow + 1:vrow + 2, :HIDDEN]                # (1, H)
        b1k = p_ref[vrow + 2:vrow + 3, :EXPANDED]               # (1, M)
        b2k = p_ref[vrow + 3:vrow + 4, :HIDDEN]                 # (1, H)
        gammak = p_ref[vrow + 4:vrow + 5, :HIDDEN]              # (1, H)

        # LayerNorm over the last axis (biased variance, torch eps)
        mean = jnp.mean(h, axis=-1, keepdims=True)
        centered = h - mean
        var = jnp.mean(centered * centered, axis=-1, keepdims=True)
        normed = centered * jax.lax.rsqrt(var + LN_EPS) * ln_w + ln_b

        # branch: Linear -> ReLU -> Linear (MXU, f32 accumulate)
        z = jnp.dot(normed, w1, preferred_element_type=jnp.float32) + b1k
        z = jnp.maximum(z, 0.0)
        branch = jnp.dot(z, w2, preferred_element_type=jnp.float32) + b2k

        # residual with learnable per-channel scale gamma
        h = h + branch * gammak

    # single full-view store of the (TB, HIDDEN) result
    out_ref[...] = h.astype(out_ref.dtype)


def dense_res_backbone(x, packed_params, *, tile_b=None):
    """x: (B, 3) float32, packed_params: (SLAB_ROWS, SLAB_W) f32 -> (B, HIDDEN) f32."""
    B = x.shape[0]
    if tile_b is None:
        tile_b = B if B <= 512 else 256      # one grid step at small batch
    assert B % tile_b == 0 and tile_b % 8 == 0
    grid = (B // tile_b,)

    return pl.pallas_call(
        _backbone_kernel,
        out_shape=jax.ShapeDtypeStruct((B, HIDDEN), jnp.float32),
        grid_spec=pltpu.PrefetchScalarGridSpec(
            num_scalar_prefetch=0,
            grid=grid,
            in_specs=[
                pl.BlockSpec((tile_b, IN_FEATURES), lambda i: (i, 0)),   # x tile
                pl.BlockSpec((SLAB_ROWS, SLAB_W), lambda i: (0, 0)),     # param slab
            ],
            out_specs=pl.BlockSpec((tile_b, HIDDEN), lambda i: (i, 0)),
        ),
        compiler_params=pltpu.CompilerParams(
            dimension_semantics=("parallel",)),
    )(x, packed_params)


def pack_params(params):
    """Pack the 9 parameter tensors into one flat f32 slab (SLAB_ROWS, SLAB_W).

    rows [0, 288): matrices; per block k:
        rows [96k, 96k+H)      = w1  (H x M)
        rows [96k+H, 96k+96)   = w2  (M x H), lanes [H, SLAB_W) zero-padded.
    rows [288, 296): head vectors: rows 288..290 = win, row 291 = bin, rest pad.
    rows [296 + 8k, 296 + 8k + 8): block-k vectors lnw, lnb, b1, b2, gamma + pad.
    All in-kernel slice offsets land on 8-sublane boundaries.
    """
    win, bin_, lnw, lnb, w1, b1, w2, b2, gamma = params

    def pad_last(a, width=SLAB_W):
        return jnp.pad(a, [(0, 0)] * (a.ndim - 1) + [(0, width - a.shape[-1])])

    # matrix section
    w2p = pad_last(w2)                                        # (N, M, SLAB_W)
    mat = jnp.concatenate([w1, w2p], axis=1)                  # (N, H + M, SLAB_W)
    mat = mat.reshape(MAT_ROWS, SLAB_W)

    # head vector rows (8 rows)
    head = jnp.zeros((8, SLAB_W), jnp.float32)
    head = head.at[:IN_FEATURES, :HIDDEN].set(win)
    head = head.at[IN_FEATURES, :HIDDEN].set(bin_)

    # per-block vector rows (8 rows each)
    blocks = []
    for k in range(N_BLOCKS):
        blk = jnp.zeros((8, SLAB_W), jnp.float32)
        blk = blk.at[0, :HIDDEN].set(lnw[k])
        blk = blk.at[1, :HIDDEN].set(lnb[k])
        blk = blk.at[2, :EXPANDED].set(b1[k])
        blk = blk.at[3, :HIDDEN].set(b2[k])
        blk = blk.at[4, :HIDDEN].set(gamma[k])
        blocks.append(blk)

    slab = jnp.concatenate([mat, head] + blocks, axis=0)      # (320, 64)
    assert slab.shape == (SLAB_ROWS, SLAB_W)
    return slab


def init_params(key):
    """Deterministic synthetic parameters (natural per-tensor layout).

    Weights are stored (in_features, out_features) so the kernel computes
    x @ W + b (== torch's x @ W.T with its (out, in) storage).
    NOTE: torch initializes gamma to 1e-6; here gamma is O(1) so the
    correctness check actually exercises the residual-branch math.
    """
    ks = jax.random.split(key, 2 + 5 * N_BLOCKS)
    it = iter(range(len(ks)))

    def lin_w(k, fan_in, fan_out):
        bound = 1.0 / jnp.sqrt(jnp.float32(fan_in))
        return jax.random.uniform(k, (fan_in, fan_out), jnp.float32, -bound, bound)

    win = lin_w(ks[next(it)], IN_FEATURES, HIDDEN)                       # (3, H)
    bin_ = jax.random.uniform(ks[next(it)], (HIDDEN,), jnp.float32, -0.5, 0.5)

    lnw, lnb, w1, b1, w2, b2, gamma = [], [], [], [], [], [], []
    for _ in range(N_BLOCKS):
        lnw.append(jnp.ones((HIDDEN,), jnp.float32))                     # LN weight init
        lnb.append(jnp.zeros((HIDDEN,), jnp.float32))                    # LN bias init
        w1.append(lin_w(ks[next(it)], HIDDEN, EXPANDED))
        b1.append(jax.random.uniform(ks[next(it)], (EXPANDED,), jnp.float32, -0.1, 0.1))
        w2.append(lin_w(ks[next(it)], EXPANDED, HIDDEN))
        b2.append(jax.random.uniform(ks[next(it)], (HIDDEN,), jnp.float32, -0.1, 0.1))
        gamma.append(jax.random.uniform(ks[next(it)], (HIDDEN,), jnp.float32, 0.5, 1.5))

    stack = lambda xs: jnp.stack(xs, axis=0)
    return (win, bin_, stack(lnw), stack(lnb), stack(w1), stack(b1),
            stack(w2), stack(b2), stack(gamma))


def reference_forward(x, params):
    (win, bin_, lnw, lnb, w1, b1, w2, b2, gamma) = params
    # Mirror the kernel's FMA-style input projection (exact f32).
    h = x[:, 0:1] * win[0] + x[:, 1:2] * win[1] + x[:, 2:3] * win[2] + bin_
    for k in range(N_BLOCKS):
        mean = jnp.mean(h, axis=-1, keepdims=True)
        var = jnp.mean((h - mean) ** 2, axis=-1, keepdims=True)
        normed = (h - mean) * jax.lax.rsqrt(var + LN_EPS) * lnw[k] + lnb[k]
        z = jnp.maximum(jnp.dot(normed, w1[k]) + b1[k], 0.0)
        h = h + (jnp.dot(z, w2[k]) + b2[k]) * gamma[k]
    return h


if __name__ == "__main__":
    key = jax.random.PRNGKey(0)
    kx, kp = jax.random.split(key)
    x = jax.random.normal(kx, (BATCH, IN_FEATURES), dtype=jnp.float32)
    params = init_params(kp)
    packed = pack_params(params)

    out = dense_res_backbone(x, packed)
    out = jax.block_until_ready(out)

    ref = reference_forward(x, params)
    assert out.shape == (BATCH, HIDDEN)
    # Tolerance allows for MXU default-precision f32 matmul rounding vs XLA.
    max_err = jnp.max(jnp.abs(out - ref))
    assert jnp.allclose(out, ref, atol=1e-3, rtol=1e-3), f"mismatch vs reference: {max_err}"

    print("KERNEL_OK")
</pallas_src>

<mosaic_0001>
module attributes {stable_mosaic.version = 11 : i64} {
  func.func @_backbone_kernel(%arg0: i32, %arg1: memref<16x3xf32, #tpu.memory_space<vmem>>, %arg2: memref<320x64xf32, #tpu.memory_space<vmem>>, %arg3: memref<16x32xf32, #tpu.memory_space<vmem>>) attributes {dimension_semantics = [#tpu.dimension_semantics<parallel>], iteration_bounds = array<i64: 1>, scalar_prefetch = 0 : i64, scratch_operands = 0 : i64, tpu.core_type = #tpu.core_type<tc>, window_params = [{transform_indices = @transform_0, window_bounds = array<i64: 16, 3>}, {pipeline_mode = #tpu.pipeline_mode<synchronous>, transform_indices = @transform_1, window_bounds = array<i64: 320, 64>}, {transform_indices = @transform_2, window_bounds = array<i64: 16, 32>}]} {
    %c0 = arith.constant 0 : index
    %c0_0 = arith.constant 0 : index
    %0 = vector.load %arg1[%c0, %c0_0] : memref<16x3xf32, #tpu.memory_space<vmem>>, vector<16x3xf32>
    %c291 = arith.constant 291 : index
    %c0_1 = arith.constant 0 : index
    %1 = vector.load %arg2[%c291, %c0_1] : memref<320x64xf32, #tpu.memory_space<vmem>>, vector<1x32xf32>
    %2 = vector.extract_strided_slice %0 {offsets = [0, 0], sizes = [16, 1], strides = [1, 1]} : vector<16x3xf32> to vector<16x1xf32>
    %c288 = arith.constant 288 : index
    %c0_2 = arith.constant 0 : index
    %3 = vector.load %arg2[%c288, %c0_2] : memref<320x64xf32, #tpu.memory_space<vmem>>, vector<1x32xf32>
    %4 = vector.broadcast %2 : vector<16x1xf32> to vector<16x32xf32>
    %5 = vector.broadcast %3 : vector<1x32xf32> to vector<16x32xf32>
    %6 = arith.mulf %4, %5 : vector<16x32xf32>
    %7 = vector.broadcast %1 : vector<1x32xf32> to vector<16x32xf32>
    %8 = arith.addf %7, %6 : vector<16x32xf32>
    %9 = vector.extract_strided_slice %0 {offsets = [0, 1], sizes = [16, 1], strides = [1, 1]} : vector<16x3xf32> to vector<16x1xf32>
    %c289 = arith.constant 289 : index
    %c0_3 = arith.constant 0 : index
    %10 = vector.load %arg2[%c289, %c0_3] : memref<320x64xf32, #tpu.memory_space<vmem>>, vector<1x32xf32>
    %11 = vector.broadcast %9 : vector<16x1xf32> to vector<16x32xf32>
    %12 = vector.broadcast %10 : vector<1x32xf32> to vector<16x32xf32>
    %13 = arith.mulf %11, %12 : vector<16x32xf32>
    %14 = arith.addf %8, %13 : vector<16x32xf32>
    %15 = vector.extract_strided_slice %0 {offsets = [0, 2], sizes = [16, 1], strides = [1, 1]} : vector<16x3xf32> to vector<16x1xf32>
    %c290 = arith.constant 290 : index
    %c0_4 = arith.constant 0 : index
    %16 = vector.load %arg2[%c290, %c0_4] : memref<320x64xf32, #tpu.memory_space<vmem>>, vector<1x32xf32>
    %17 = vector.broadcast %15 : vector<16x1xf32> to vector<16x32xf32>
    %18 = vector.broadcast %16 : vector<1x32xf32> to vector<16x32xf32>
    %19 = arith.mulf %17, %18 : vector<16x32xf32>
    %20 = arith.addf %14, %19 : vector<16x32xf32>
    %c0_5 = arith.constant 0 : index
    %c0_6 = arith.constant 0 : index
    %21 = vector.load %arg2[%c0_5, %c0_6] : memref<320x64xf32, #tpu.memory_space<vmem>>, vector<32x64xf32>
    %c32 = arith.constant 32 : index
    %c0_7 = arith.constant 0 : index
    %22 = vector.load %arg2[%c32, %c0_7] : memref<320x64xf32, #tpu.memory_space<vmem>>, vector<64x32xf32>
    %c296 = arith.constant 296 : index
    %c0_8 = arith.constant 0 : index
    %23 = vector.load %arg2[%c296, %c0_8] : memref<320x64xf32, #tpu.memory_space<vmem>>, vector<1x32xf32>
    %c297 = arith.constant 297 : index
    %c0_9 = arith.constant 0 : index
    %24 = vector.load %arg2[%c297, %c0_9] : memref<320x64xf32, #tpu.memory_space<vmem>>, vector<1x32xf32>
    %c298 = arith.constant 298 : index
    %c0_10 = arith.constant 0 : index
    %25 = vector.load %arg2[%c298, %c0_10] : memref<320x64xf32, #tpu.memory_space<vmem>>, vector<1x64xf32>
    %c299 = arith.constant 299 : index
    %c0_11 = arith.constant 0 : index
    %26 = vector.load %arg2[%c299, %c0_11] : memref<320x64xf32, #tpu.memory_space<vmem>>, vector<1x32xf32>
    %c300 = arith.constant 300 : index
    %c0_12 = arith.constant 0 : index
    %27 = vector.load %arg2[%c300, %c0_12] : memref<320x64xf32, #tpu.memory_space<vmem>>, vector<1x32xf32>
    %cst = arith.constant dense<0.000000e+00> : vector<16xf32>
    %28 = vector.multi_reduction <add>, %20, %cst [1] : vector<16x32xf32> to vector<16xf32>
    %29 = vector.shape_cast %28 : vector<16xf32> to vector<16x1xf32>
    %cst_13 = arith.constant 3.200000e+01 : f32
    %30 = vector.broadcast %cst_13 : f32 to vector<16x1xf32>
    %31 = arith.divf %29, %30 : vector<16x1xf32>
    %32 = vector.broadcast %31 : vector<16x1xf32> to vector<16x32xf32>
    %33 = arith.subf %20, %32 : vector<16x32xf32>
    %34 = arith.mulf %33, %33 : vector<16x32xf32>
    %cst_14 = arith.constant dense<0.000000e+00> : vector<16xf32>
    %35 = vector.multi_reduction <add>, %34, %cst_14 [1] : vector<16x32xf32> to vector<16xf32>
    %36 = vector.shape_cast %35 : vector<16xf32> to vector<16x1xf32>
    %cst_15 = arith.constant 3.200000e+01 : f32
    %37 = vector.broadcast %cst_15 : f32 to vector<16x1xf32>
    %38 = arith.divf %36, %37 : vector<16x1xf32>
    %cst_16 = arith.constant 9.99999974E-6 : f32
    %39 = vector.broadcast %cst_16 : f32 to vector<16x1xf32>
    %40 = arith.addf %38, %39 : vector<16x1xf32>
    %41 = math.rsqrt %40 : vector<16x1xf32>
    %42 = vector.broadcast %41 : vector<16x1xf32> to vector<16x32xf32>
    %43 = arith.mulf %33, %42 : vector<16x32xf32>
    %44 = vector.broadcast %23 : vector<1x32xf32> to vector<16x32xf32>
    %45 = arith.mulf %43, %44 : vector<16x32xf32>
    %46 = vector.broadcast %24 : vector<1x32xf32> to vector<16x32xf32>
    %47 = arith.addf %45, %46 : vector<16x32xf32>
    %cst_17 = arith.constant dense<0.000000e+00> : vector<16x64xf32>
    %48 = tpu.matmul %47, %21, %cst_17 {dimension_numbers = #tpu.dot_dimension_numbers<[1], [0], [0], [1], [0, 0, 1, 1], [], []>} : vector<16x32xf32>, vector<32x64xf32>, vector<16x64xf32> -> vector<16x64xf32>
    %49 = vector.broadcast %25 : vector<1x64xf32> to vector<16x64xf32>
    %50 = arith.addf %48, %49 : vector<16x64xf32>
    %cst_18 = arith.constant 0.000000e+00 : f32
    %51 = vector.broadcast %cst_18 : f32 to vector<16x64xf32>
    %52 = arith.maximumf %50, %51 : vector<16x64xf32>
    %cst_19 = arith.constant dense<0.000000e+00> : vector<16x32xf32>
    %53 = tpu.matmul %52, %22, %cst_19 {dimension_numbers = #tpu.dot_dimension_numbers<[1], [0], [0], [1], [0, 0, 1, 1], [], []>} : vector<16x64xf32>, vector<64x32xf32>, vector<16x32xf32> -> vector<16x32xf32>
    %54 = vector.broadcast %26 : vector<1x32xf32> to vector<16x32xf32>
    %55 = arith.addf %53, %54 : vector<16x32xf32>
    %56 = vector.broadcast %27 : vector<1x32xf32> to vector<16x32xf32>
    %57 = arith.mulf %55, %56 : vector<16x32xf32>
    %58 = arith.addf %20, %57 : vector<16x32xf32>
    %c96 = arith.constant 96 : index
    %c0_20 = arith.constant 0 : index
    %59 = vector.load %arg2[%c96, %c0_20] : memref<320x64xf32, #tpu.memory_space<vmem>>, vector<32x64xf32>
    %c128 = arith.constant 128 : index
    %c0_21 = arith.constant 0 : index
    %60 = vector.load %arg2[%c128, %c0_21] : memref<320x64xf32, #tpu.memory_space<vmem>>, vector<64x32xf32>
    %c304 = arith.constant 304 : index
    %c0_22 = arith.constant 0 : index
    %61 = vector.load %arg2[%c304, %c0_22] : memref<320x64xf32, #tpu.memory_space<vmem>>, vector<1x32xf32>
    %c305 = arith.constant 305 : index
    %c0_23 = arith.constant 0 : index
    %62 = vector.load %arg2[%c305, %c0_23] : memref<320x64xf32, #tpu.memory_space<vmem>>, vector<1x32xf32>
    %c306 = arith.constant 306 : index
    %c0_24 = arith.constant 0 : index
    %63 = vector.load %arg2[%c306, %c0_24] : memref<320x64xf32, #tpu.memory_space<vmem>>, vector<1x64xf32>
    %c307 = arith.constant 307 : index
    %c0_25 = arith.constant 0 : index
    %64 = vector.load %arg2[%c307, %c0_25] : memref<320x64xf32, #tpu.memory_space<vmem>>, vector<1x32xf32>
    %c308 = arith.constant 308 : index
    %c0_26 = arith.constant 0 : index
    %65 = vector.load %arg2[%c308, %c0_26] : memref<320x64xf32, #tpu.memory_space<vmem>>, vector<1x32xf32>
    %cst_27 = arith.constant dense<0.000000e+00> : vector<16xf32>
    %66 = vector.multi_reduction <add>, %58, %cst_27 [1] : vector<16x32xf32> to vector<16xf32>
    %67 = vector.shape_cast %66 : vector<16xf32> to vector<16x1xf32>
    %cst_28 = arith.constant 3.200000e+01 : f32
    %68 = vector.broadcast %cst_28 : f32 to vector<16x1xf32>
    %69 = arith.divf %67, %68 : vector<16x1xf32>
    %70 = vector.broadcast %69 : vector<16x1xf32> to vector<16x32xf32>
    %71 = arith.subf %58, %70 : vector<16x32xf32>
    %72 = arith.mulf %71, %71 : vector<16x32xf32>
    %cst_29 = arith.constant dense<0.000000e+00> : vector<16xf32>
    %73 = vector.multi_reduction <add>, %72, %cst_29 [1] : vector<16x32xf32> to vector<16xf32>
    %74 = vector.shape_cast %73 : vector<16xf32> to vector<16x1xf32>
    %cst_30 = arith.constant 3.200000e+01 : f32
    %75 = vector.broadcast %cst_30 : f32 to vector<16x1xf32>
    %76 = arith.divf %74, %75 : vector<16x1xf32>
    %cst_31 = arith.constant 9.99999974E-6 : f32
    %77 = vector.broadcast %cst_31 : f32 to vector<16x1xf32>
    %78 = arith.addf %76, %77 : vector<16x1xf32>
    %79 = math.rsqrt %78 : vector<16x1xf32>
    %80 = vector.broadcast %79 : vector<16x1xf32> to vector<16x32xf32>
    %81 = arith.mulf %71, %80 : vector<16x32xf32>
    %82 = vector.broadcast %61 : vector<1x32xf32> to vector<16x32xf32>
    %83 = arith.mulf %81, %82 : vector<16x32xf32>
    %84 = vector.broadcast %62 : vector<1x32xf32> to vector<16x32xf32>
    %85 = arith.addf %83, %84 : vector<16x32xf32>
    %cst_32 = arith.constant dense<0.000000e+00> : vector<16x64xf32>
    %86 = tpu.matmul %85, %59, %cst_32 {dimension_numbers = #tpu.dot_dimension_numbers<[1], [0], [0], [1], [0, 0, 1, 1], [], []>} : vector<16x32xf32>, vector<32x64xf32>, vector<16x64xf32> -> vector<16x64xf32>
    %87 = vector.broadcast %63 : vector<1x64xf32> to vector<16x64xf32>
    %88 = arith.addf %86, %87 : vector<16x64xf32>
    %cst_33 = arith.constant 0.000000e+00 : f32
    %89 = vector.broadcast %cst_33 : f32 to vector<16x64xf32>
    %90 = arith.maximumf %88, %89 : vector<16x64xf32>
    %cst_34 = arith.constant dense<0.000000e+00> : vector<16x32xf32>
    %91 = tpu.matmul %90, %60, %cst_34 {dimension_numbers = #tpu.dot_dimension_numbers<[1], [0], [0], [1], [0, 0, 1, 1], [], []>} : vector<16x64xf32>, vector<64x32xf32>, vector<16x32xf32> -> vector<16x32xf32>
    %92 = vector.broadcast %64 : vector<1x32xf32> to vector<16x32xf32>
    %93 = arith.addf %91, %92 : vector<16x32xf32>
    %94 = vector.broadcast %65 : vector<1x32xf32> to vector<16x32xf32>
    %95 = arith.mulf %93, %94 : vector<16x32xf32>
    %96 = arith.addf %58, %95 : vector<16x32xf32>
    %c192 = arith.constant 192 : index
    %c0_35 = arith.constant 0 : index
    %97 = vector.load %arg2[%c192, %c0_35] : memref<320x64xf32, #tpu.memory_space<vmem>>, vector<32x64xf32>
    %c224 = arith.constant 224 : index
    %c0_36 = arith.constant 0 : index
    %98 = vector.load %arg2[%c224, %c0_36] : memref<320x64xf32, #tpu.memory_space<vmem>>, vector<64x32xf32>
    %c312 = arith.constant 312 : index
    %c0_37 = arith.constant 0 : index
    %99 = vector.load %arg2[%c312, %c0_37] : memref<320x64xf32, #tpu.memory_space<vmem>>, vector<1x32xf32>
    %c313 = arith.constant 313 : index
    %c0_38 = arith.constant 0 : index
    %100 = vector.load %arg2[%c313, %c0_38] : memref<320x64xf32, #tpu.memory_space<vmem>>, vector<1x32xf32>
    %c314 = arith.constant 314 : index
    %c0_39 = arith.constant 0 : index
    %101 = vector.load %arg2[%c314, %c0_39] : memref<320x64xf32, #tpu.memory_space<vmem>>, vector<1x64xf32>
    %c315 = arith.constant 315 : index
    %c0_40 = arith.constant 0 : index
    %102 = vector.load %arg2[%c315, %c0_40] : memref<320x64xf32, #tpu.memory_space<vmem>>, vector<1x32xf32>
    %c316 = arith.constant 316 : index
    %c0_41 = arith.constant 0 : index
    %103 = vector.load %arg2[%c316, %c0_41] : memref<320x64xf32, #tpu.memory_space<vmem>>, vector<1x32xf32>
    %cst_42 = arith.constant dense<0.000000e+00> : vector<16xf32>
    %104 = vector.multi_reduction <add>, %96, %cst_42 [1] : vector<16x32xf32> to vector<16xf32>
    %105 = vector.shape_cast %104 : vector<16xf32> to vector<16x1xf32>
    %cst_43 = arith.constant 3.200000e+01 : f32
    %106 = vector.broadcast %cst_43 : f32 to vector<16x1xf32>
    %107 = arith.divf %105, %106 : vector<16x1xf32>
    %108 = vector.broadcast %107 : vector<16x1xf32> to vector<16x32xf32>
    %109 = arith.subf %96, %108 : vector<16x32xf32>
    %110 = arith.mulf %109, %109 : vector<16x32xf32>
    %cst_44 = arith.constant dense<0.000000e+00> : vector<16xf32>
    %111 = vector.multi_reduction <add>, %110, %cst_44 [1] : vector<16x32xf32> to vector<16xf32>
    %112 = vector.shape_cast %111 : vector<16xf32> to vector<16x1xf32>
    %cst_45 = arith.constant 3.200000e+01 : f32
    %113 = vector.broadcast %cst_45 : f32 to vector<16x1xf32>
    %114 = arith.divf %112, %113 : vector<16x1xf32>
    %cst_46 = arith.constant 9.99999974E-6 : f32
    %115 = vector.broadcast %cst_46 : f32 to vector<16x1xf32>
    %116 = arith.addf %114, %115 : vector<16x1xf32>
    %117 = math.rsqrt %116 : vector<16x1xf32>
    %118 = vector.broadcast %117 : vector<16x1xf32> to vector<16x32xf32>
    %119 = arith.mulf %109, %118 : vector<16x32xf32>
    %120 = vector.broadcast %99 : vector<1x32xf32> to vector<16x32xf32>
    %121 = arith.mulf %119, %120 : vector<16x32xf32>
    %122 = vector.broadcast %100 : vector<1x32xf32> to vector<16x32xf32>
    %123 = arith.addf %121, %122 : vector<16x32xf32>
    %cst_47 = arith.constant dense<0.000000e+00> : vector<16x64xf32>
    %124 = tpu.matmul %123, %97, %cst_47 {dimension_numbers = #tpu.dot_dimension_numbers<[1], [0], [0], [1], [0, 0, 1, 1], [], []>} : vector<16x32xf32>, vector<32x64xf32>, vector<16x64xf32> -> vector<16x64xf32>
    %125 = vector.broadcast %101 : vector<1x64xf32> to vector<16x64xf32>
    %126 = arith.addf %124, %125 : vector<16x64xf32>
    %cst_48 = arith.constant 0.000000e+00 : f32
    %127 = vector.broadcast %cst_48 : f32 to vector<16x64xf32>
    %128 = arith.maximumf %126, %127 : vector<16x64xf32>
    %cst_49 = arith.constant dense<0.000000e+00> : vector<16x32xf32>
    %129 = tpu.matmul %128, %98, %cst_49 {dimension_numbers = #tpu.dot_dimension_numbers<[1], [0], [0], [1], [0, 0, 1, 1], [], []>} : vector<16x64xf32>, vector<64x32xf32>, vector<16x32xf32> -> vector<16x32xf32>
    %130 = vector.broadcast %102 : vector<1x32xf32> to vector<16x32xf32>
    %131 = arith.addf %129, %130 : vector<16x32xf32>
    %132 = vector.broadcast %103 : vector<1x32xf32> to vector<16x32xf32>
    %133 = arith.mulf %131, %132 : vector<16x32xf32>
    %134 = arith.addf %96, %133 : vector<16x32xf32>
    %c0_50 = arith.constant 0 : index
    %c0_51 = arith.constant 0 : index
    %135 = vector.load %arg3[%c0_50, %c0_51] : memref<16x32xf32, #tpu.memory_space<vmem>>, vector<16x32xf32>
    tpu.vector_store %arg3[%c0_50, %c0_51], %134 {strides = array<i32>} : memref<16x32xf32, #tpu.memory_space<vmem>>, vector<16x32xf32>,
    return
  }
  func.func @transform_0(%arg0: i32) -> (i32, i32) {
    %c0_i32 = arith.constant 0 : i32
    %c0_i32_0 = arith.constant 0 : i32
    return %arg0, %c0_i32 : i32, i32
  }
  func.func @transform_1(%arg0: i32) -> (i32, i32) {
    %c0_i32 = arith.constant 0 : i32
    %c0_i32_0 = arith.constant 0 : i32
    %c0_i32_1 = arith.constant 0 : i32
    return %c0_i32, %c0_i32_0 : i32, i32
  }
  func.func @transform_2(%arg0: i32) -> (i32, i32) {
    %c0_i32 = arith.constant 0 : i32
    %c0_i32_0 = arith.constant 0 : i32
    return %arg0, %c0_i32 : i32, i32
  }
}

</mosaic_0001>

<llo_original>
// kernel: tpu_custom_call.1
$region0: #{tpu_custom_call.1}
  #allocation0 [shape = 'u32[]', space=smem, size = 0x4, offset = 0x4, fixed_abs, tag = 'smem constant byte address 0x4 - core index']
  #allocation1 [shape = 'u32[144,128]{1,0:T(1,128)}', space=vmem, size = 0x12000, scoped, tag = 'internal scratch']
  %s0 = inlined_call_operand.vmem [shape: f32[16,3], index: 0, kind: input, shape index: {}]
  %s1 = inlined_call_operand.vmem [shape: f32[320,64], index: 1, kind: input, shape index: {}]
  %s2 = inlined_call_operand.hbm [shape: f32[16,32], index: 2, kind: output, shape index: {}]
  %s3 = sld [smem:[#allocation0]]
  $region18: #{tpu_custom_call.1} parent=0
    _
  %s5 = ssub.s32 1, %s3
  %s6 = scalar_select 0, %s5, %s3
  $region1: #{tpu_custom_call.1} parent=0
    #allocation2 [shape = 'u8[8192]{0}', space=vmem, size = 0x2000, scoped, tag = 'output window, operand 0, single buffered']
    #allocation3 [shape = 's32[1]{0}', space=sflag, size = 0x4, scoped, tag = 'scoped memory for tpu_custom_call.1']
    %7 = vsyncpa [#allocation3], 0
    // Predicated region
    $region2: #{tpu_custom_call.1} parent=1 // pred_check
      _
    $region3: #{tpu_custom_call.1} parent=1 // pred_check_branch
      %9 = sbr.rel (0) target = $region5
    $region4: #{tpu_custom_call.1} parent=1 // pred_region
      _
    $region5: #{tpu_custom_call.1} parent=1 // pred_fallthru
      _
    // Predicated region
    $region6: #{tpu_custom_call.1} parent=1 // pred_check
      _
    $region7: #{tpu_custom_call.1} parent=1 // pred_check_branch
      %11 = sbr.rel (0) target = $region9
    $region8: #{tpu_custom_call.1} parent=1 // pred_region
      _
    $region9: #{tpu_custom_call.1} parent=1 // pred_fallthru
      _
    %v12 = vld [vmem:[%s0] sm:$0xff]
    %v13 = vld [vmem:[%s0 + $0x8] sm:$0xff]
    %v14 = vld [vmem:[%s1 + $0x123] sm:$0x1]
    %v15 = vld [vmem:[%s1 + $0x120] sm:$0x1]
    %17 = vset.pattern.permute.xlu0 0
    %18 = vperm.xlu0 %17, %v12
    %v19 = vpop.permute.xlu0 %18
    %22 = vset.pattern.permute.xlu0 0
    %23 = vperm.xlu0 %22, %v13
    %v24 = vpop.permute.xlu0 %23
    %v26 = vlaneseq
    %v27 = vshrl.u32 %v26, 7
    %v28 = vsub.s32 0, %v27
    %v29 = vrot.slane %v15, %v28
    %v30 = vmul.f32 %v19, %v29
    %v31 = vmul.f32 %v24, %v29
    %v32 = vlaneseq
    %v33 = vshrl.u32 %v32, 7
    %v34 = vsub.s32 0, %v33
    %v35 = vrot.slane %v14, %v34
    %v36 = vadd.f32 %v35, %v30
    %v37 = vadd.f32 %v35, %v31
    %v38 = vld [vmem:[%s1 + $0x121] sm:$0x1]
    %39 = vset.pattern.permute.xlu0 1
    %40 = vperm.xlu0 %39, %v12
    %v41 = vpop.permute.xlu0 %40
    %43 = vset.pattern.permute.xlu0 1
    %44 = vperm.xlu0 %43, %v13
    %v45 = vpop.permute.xlu0 %44
    %v47 = vlaneseq
    %v48 = vshrl.u32 %v47, 7
    %v49 = vsub.s32 0, %v48
    %v50 = vrot.slane %v38, %v49
    %v51 = vmul.f32 %v41, %v50
    %v52 = vmul.f32 %v45, %v50
    %v53 = vadd.f32 %v36, %v51
    %v54 = vadd.f32 %v37, %v52
    %v55 = vld [vmem:[%s1 + $0x122] sm:$0x1]
    %56 = vset.pattern.permute.xlu0 2
    %57 = vperm.xlu0 %56, %v12
    %v58 = vpop.permute.xlu0 %57
    %60 = vset.pattern.permute.xlu0 2
    %61 = vperm.xlu0 %60, %v13
    %v62 = vpop.permute.xlu0 %61
    %v64 = vlaneseq
    %v65 = vshrl.u32 %v64, 7
    %v66 = vsub.s32 0, %v65
    %v67 = vrot.slane %v55, %v66
    %v68 = vmul.f32 %v58, %v67
    %v69 = vmul.f32 %v62, %v67
    %v70 = vadd.f32 %v53, %v68
    %v71 = vadd.f32 %v54, %v69
    %v72 = vld [vmem:[%s1] sm:$0xff]
    %v73 = vld [vmem:[%s1 + $0x8] sm:$0xff]
    %v74 = vld [vmem:[%s1 + $0x10] sm:$0xff]
    %v75 = vld [vmem:[%s1 + $0x18] sm:$0xff]
    %v76 = vld [vmem:[%s1 + $0x20] sm:$0xff]
    %v77 = vld [vmem:[%s1 + $0x28] sm:$0xff]
    %v78 = vld [vmem:[%s1 + $0x30] sm:$0xff]
    %v79 = vld [vmem:[%s1 + $0x38] sm:$0xff]
    %v80 = vld [vmem:[%s1 + $0x40] sm:$0xff]
    %v81 = vld [vmem:[%s1 + $0x48] sm:$0xff]
    %v82 = vld [vmem:[%s1 + $0x50] sm:$0xff]
    %v83 = vld [vmem:[%s1 + $0x58] sm:$0xff]
    %v84 = vld [vmem:[%s1 + $0x128] sm:$0x1]
    %v85 = vld [vmem:[%s1 + $0x129] sm:$0x1]
    %v86 = vld [vmem:[%s1 + $0x12a] sm:$0x1]
    %v87 = vld [vmem:[%s1 + $0x12b] sm:$0x1]
    %v88 = vld [vmem:[%s1 + $0x12c] sm:$0x1]
    %vm89 = vcmask 261120
    %v90 = vsel %vm89, %v70, 0.0
    %91 = vadd.xlane.f32.xlu0 %v90
    %v92 = vpop.xlane.xlu0 %91
    %v93 = vsel %vm89, %v71, 0.0
    %94 = vadd.xlane.f32.xlu0 %v93
    %v95 = vpop.xlane.xlu0 %94
    %v96 = vrcp.pop 32.0
    %v97 = vmul.f32 %v92, %v96
    %v98 = vmul.f32 %v95, %v96
    %v99 = vsub.f32 %v70, %v97
    %v100 = vsub.f32 %v71, %v98
    %v101 = vmul.f32 %v99, %v99
    %v102 = vmul.f32 %v100, %v100
    %v103 = vsel %vm89, %v101, 0.0
    %104 = vadd.xlane.f32.xlu0 %v103
    %v105 = vpop.xlane.xlu0 %104
    %v106 = vsel %vm89, %v102, 0.0
    %107 = vadd.xlane.f32.xlu0 %v106
    %v108 = vpop.xlane.xlu0 %107
    %v109 = vmul.f32 %v105, %v96
    %v110 = vmul.f32 %v108, %v96
    %v111 = vadd.f32 %v109, 1e-05
    %v112 = vadd.f32 %v110, 1e-05
    %v113 = vrsqrt.pop %v111
    %v114 = vrsqrt.pop %v112
    %v115 = vmul.f32 %v99, %v113
    %v116 = vmul.f32 %v100, %v114
    %v117 = vlaneseq
    %v118 = vshrl.u32 %v117, 7
    %v119 = vsub.s32 0, %v118
    %v120 = vrot.slane %v84, %v119
    %v121 = vmul.f32 %v115, %v120
    %v122 = vmul.f32 %v116, %v120
    %v123 = vlaneseq
    %v124 = vshrl.u32 %v123, 7
    %v125 = vsub.s32 0, %v124
    %v126 = vrot.slane %v85, %v125
    %v127 = vadd.f32 %v121, %v126
    %v128 = vadd.f32 %v122, %v126
    %v129 = vlaneseq
    %v130 = vshrl.u32 %v129, 7
    %v131 = vsub.s32 0, %v130
    %v132 = vrot.slane %v86, %v131
    %v134 = vsel %vm89, %v127, 0
    %v137 = vsel %vm89, %v128, 0
    %139 = vmatprep.subr.mxu0 0.0
    %140 = vmatpush1.msra.mxu0 %v72
    %141 = vmatprep.subr.mxu0 0.0
    %142 = vmatpush1.msra.mxu0 %v73
    %143 = vmatprep.subr.mxu0 0.0
    %144 = vmatpush1.msra.mxu0 %v74
    %145 = vmatprep.subr.mxu0 0.0
    %146 = vmatpush1.msra.mxu0 %v75
    %147 = vmatprep.subr.mxu0 0.0
    %148 = vmatpush1.msra.mxu0 0.0
    %149 = vmatprep.subr.mxu0 0.0
    %150 = vmatpush1.msra.mxu0 0.0
    %151 = vmatprep.subr.mxu0 0.0
    %152 = vmatpush1.msra.mxu0 0.0
    %153 = vmatprep.subr.mxu0 0.0
    %154 = vmatpush1.msra.mxu0 0.0
    %155 = vmatprep.subr.mxu0 0.0
    %156 = vmatpush1.msra.mxu0 0.0
    %157 = vmatprep.subr.mxu0 0.0
    %158 = vmatpush1.msra.mxu0 0.0
    %159 = vmatprep.subr.mxu0 0.0
    %160 = vmatpush1.msra.mxu0 0.0
    %161 = vmatprep.subr.mxu0 0.0
    %162 = vmatpush1.msra.mxu0 0.0
    %163 = vmatprep.subr.mxu0 0.0
    %164 = vmatpush1.msra.mxu0 0.0
    %165 = vmatprep.subr.mxu0 0.0
    %166 = vmatpush1.msra.mxu0 0.0
    %167 = vmatprep.subr.mxu0 0.0
    %168 = vmatpush1.msra.mxu0 0.0
    %169 = vmatprep.subr.mxu0 0.0
    %170 = vmatpush1.msra.mxu0 0.0
    %171 = vmatprep.subr.mxu0 0.0
    %172 = vmatpush1.msra.mxu0 0.0
    %173 = vmatprep.subr.mxu0 0.0
    %174 = vmatpush1.msra.mxu0 0.0
    %175 = vmatprep.subr.mxu0 0.0
    %176 = vmatpush1.msra.mxu0 0.0
    %177 = vmatprep.subr.mxu0 0.0
    %178 = vmatpush1.msra.mxu0 0.0
    %179 = vmatprep.subr.mxu0 0.0
    %180 = vmatpush1.msra.mxu0 0.0
    %181 = vmatprep.subr.mxu0 0.0
    %182 = vmatpush1.msra.mxu0 0.0
    %183 = vmatprep.subr.mxu0 0.0
    %184 = vmatpush1.msra.mxu0 0.0
    %185 = vmatprep.subr.mxu0 0.0
    %186 = vmatpush1.msra.mxu0 0.0
    %187 = vmatprep.subr.mxu0 0.0
    %188 = vmatpush1.msra.mxu0 0.0
    %189 = vmatprep.subr.mxu0 0.0
    %190 = vmatpush1.msra.mxu0 0.0
    %191 = vmatprep.subr.mxu0 0.0
    %192 = vmatpush1.msra.mxu0 0.0
    %193 = vmatprep.subr.mxu0 0.0
    %194 = vmatpush1.msra.mxu0 0.0
    %195 = vmatprep.subr.mxu0 0.0
    %196 = vmatpush1.msra.mxu0 0.0
    %197 = vmatprep.subr.mxu0 0.0
    %198 = vmatpush1.msra.mxu0 0.0
    %199 = vmatprep.subr.mxu0 0.0
    %200 = vmatpush1.msra.mxu0 0.0
    %201 = vmatprep.subr.mxu0 0.0
    %202 = vmatpush1.msra.mxu0 0.0
    %203 = vmatprep.mubr.f32.mxu0 0.0
    %204 = vmatmul.mubr.f32.gmra.mrb[0].mxu0 %v134
    %v205 = vpop.f32.mrb[0].mxu0
    %v206 = vadd.f32 %v132, %v205
    %v207 = vpop.f32.mrb[0].mxu0
    %208 = vmatprep.mubr.f32.mxu0 0.0
    %209 = vmatmul.mubr.f32.gmra.mrb[0].mxu0 %v137
    %v210 = vpop.f32.mrb[0].mxu0
    %v211 = vadd.f32 %v132, %v210
    %v212 = vpop.f32.mrb[0].mxu0
    %213 = vdwg.mxu0
    %v214 = vmax.f32 %v206, 0.0
    %v215 = vmax.f32 %v211, 0.0
    %v216 = vlaneseq
    %v217 = vshrl.u32 %v216, 7
    %v218 = vsub.s32 0, %v217
    %v219 = vrot.slane %v87, %v218
    %vm220 = vcmask 523264
    %v222 = vsel %vm220, %v214, 0
    %v225 = vsel %vm220, %v215, 0
    %227 = vmatprep.subr.mxu0 0.0
    %228 = vmatpush1.msra.mxu0 %v76
    %229 = vmatprep.subr.mxu0 0.0
    %230 = vmatpush1.msra.mxu0 %v77
    %231 = vmatprep.subr.mxu0 0.0
    %232 = vmatpush1.msra.mxu0 %v78
    %233 = vmatprep.subr.mxu0 0.0
    %234 = vmatpush1.msra.mxu0 %v79
    %235 = vmatprep.subr.mxu0 0.0
    %236 = vmatpush1.msra.mxu0 %v80
    %237 = vmatprep.subr.mxu0 0.0
    %238 = vmatpush1.msra.mxu0 %v81
    %239 = vmatprep.subr.mxu0 0.0
    %240 = vmatpush1.msra.mxu0 %v82
    %241 = vmatprep.subr.mxu0 0.0
    %242 = vmatpush1.msra.mxu0 %v83
    %243 = vmatprep.subr.mxu0 0.0
    %244 = vmatpush1.msra.mxu0 0.0
    %245 = vmatprep.subr.mxu0 0.0
    %246 = vmatpush1.msra.mxu0 0.0
    %247 = vmatprep.subr.mxu0 0.0
    %248 = vmatpush1.msra.mxu0 0.0
    %249 = vmatprep.subr.mxu0 0.0
    %250 = vmatpush1.msra.mxu0 0.0
    %251 = vmatprep.subr.mxu0 0.0
    %252 = vmatpush1.msra.mxu0 0.0
    %253 = vmatprep.subr.mxu0 0.0
    %254 = vmatpush1.msra.mxu0 0.0
    %255 = vmatprep.subr.mxu0 0.0
    %256 = vmatpush1.msra.mxu0 0.0
    %257 = vmatprep.subr.mxu0 0.0
    %258 = vmatpush1.msra.mxu0 0.0
    %259 = vmatprep.subr.mxu0 0.0
    %260 = vmatpush1.msra.mxu0 0.0
    %261 = vmatprep.subr.mxu0 0.0
    %262 = vmatpush1.msra.mxu0 0.0
    %263 = vmatprep.subr.mxu0 0.0
    %264 = vmatpush1.msra.mxu0 0.0
    %265 = vmatprep.subr.mxu0 0.0
    %266 = vmatpush1.msra.mxu0 0.0
    %267 = vmatprep.subr.mxu0 0.0
    %268 = vmatpush1.msra.mxu0 0.0
    %269 = vmatprep.subr.mxu0 0.0
    %270 = vmatpush1.msra.mxu0 0.0
    %271 = vmatprep.subr.mxu0 0.0
    %272 = vmatpush1.msra.mxu0 0.0
    %273 = vmatprep.subr.mxu0 0.0
    %274 = vmatpush1.msra.mxu0 0.0
    %275 = vmatprep.subr.mxu0 0.0
    %276 = vmatpush1.msra.mxu0 0.0
    %277 = vmatprep.subr.mxu0 0.0
    %278 = vmatpush1.msra.mxu0 0.0
    %279 = vmatprep.subr.mxu0 0.0
    %280 = vmatpush1.msra.mxu0 0.0
    %281 = vmatprep.subr.mxu0 0.0
    %282 = vmatpush1.msra.mxu0 0.0
    %283 = vmatprep.subr.mxu0 0.0
    %284 = vmatpush1.msra.mxu0 0.0
    %285 = vmatprep.subr.mxu0 0.0
    %286 = vmatpush1.msra.mxu0 0.0
    %287 = vmatprep.subr.mxu0 0.0
    %288 = vmatpush1.msra.mxu0 0.0
    %289 = vmatprep.subr.mxu0 0.0
    %290 = vmatpush1.msra.mxu0 0.0
    %291 = vmatprep.mubr.f32.mxu0 0.0
    %292 = vmatmul.mubr.f32.gmra.mrb[0].mxu0 %v222
    %v293 = vpop.f32.mrb[0].mxu0
    %v294 = vadd.f32 %v219, %v293
    %v295 = vpop.f32.mrb[0].mxu0
    %296 = vmatprep.mubr.f32.mxu0 0.0
    %297 = vmatmul.mubr.f32.gmra.mrb[0].mxu0 %v225
    %v298 = vpop.f32.mrb[0].mxu0
    %v299 = vadd.f32 %v219, %v298
    %v300 = vpop.f32.mrb[0].mxu0
    %301 = vdwg.mxu0
    %v302 = vlaneseq
    %v303 = vshrl.u32 %v302, 7
    %v304 = vsub.s32 0, %v303
    %v305 = vrot.slane %v88, %v304
    %v306 = vmul.f32 %v294, %v305
    %v307 = vmul.f32 %v299, %v305
    %v308 = vadd.f32 %v70, %v306
    %v309 = vadd.f32 %v71, %v307
    %v310 = vld [vmem:[%s1 + $0x60] sm:$0xff]
    %v311 = vld [vmem:[%s1 + $0x68] sm:$0xff]
    %v312 = vld [vmem:[%s1 + $0x70] sm:$0xff]
    %v313 = vld [vmem:[%s1 + $0x78] sm:$0xff]
    %v314 = vld [vmem:[%s1 + $0x80] sm:$0xff]
    %v315 = vld [vmem:[%s1 + $0x88] sm:$0xff]
    %v316 = vld [vmem:[%s1 + $0x90] sm:$0xff]
    %v317 = vld [vmem:[%s1 + $0x98] sm:$0xff]
    %v318 = vld [vmem:[%s1 + $0xa0] sm:$0xff]
    %v319 = vld [vmem:[%s1 + $0xa8] sm:$0xff]
    %v320 = vld [vmem:[%s1 + $0xb0] sm:$0xff]
    %v321 = vld [vmem:[%s1 + $0xb8] sm:$0xff]
    %v322 = vld [vmem:[%s1 + $0x130] sm:$0x1]
    %v323 = vld [vmem:[%s1 + $0x131] sm:$0x1]
    %v324 = vld [vmem:[%s1 + $0x132] sm:$0x1]
    %v325 = vld [vmem:[%s1 + $0x133] sm:$0x1]
    %v326 = vld [vmem:[%s1 + $0x134] sm:$0x1]
    %v327 = vsel %vm89, %v308, 0.0
    %328 = vadd.xlane.f32.xlu0 %v327
    %v329 = vpop.xlane.xlu0 %328
    %v330 = vsel %vm89, %v309, 0.0
    %331 = vadd.xlane.f32.xlu0 %v330
    %v332 = vpop.xlane.xlu0 %331
    %v333 = vmul.f32 %v329, %v96
    %v334 = vmul.f32 %v332, %v96
    %v335 = vsub.f32 %v308, %v333
    %v336 = vsub.f32 %v309, %v334
    %v337 = vmul.f32 %v335, %v335
    %v338 = vmul.f32 %v336, %v336
    %v339 = vsel %vm89, %v337, 0.0
    %340 = vadd.xlane.f32.xlu0 %v339
    %v341 = vpop.xlane.xlu0 %340
    %v342 = vsel %vm89, %v338, 0.0
    %343 = vadd.xlane.f32.xlu0 %v342
    %v344 = vpop.xlane.xlu0 %343
    %v345 = vmul.f32 %v341, %v96
    %v346 = vmul.f32 %v344, %v96
    %v347 = vadd.f32 %v345, 1e-05
    %v348 = vadd.f32 %v346, 1e-05
    %v349 = vrsqrt.pop %v347
    %v350 = vrsqrt.pop %v348
    %v351 = vmul.f32 %v335, %v349
    %v352 = vmul.f32 %v336, %v350
    %v353 = vlaneseq
    %v354 = vshrl.u32 %v353, 7
    %v355 = vsub.s32 0, %v354
    %v356 = vrot.slane %v322, %v355
    %v357 = vmul.f32 %v351, %v356
    %v358 = vmul.f32 %v352, %v356
    %v359 = vlaneseq
    %v360 = vshrl.u32 %v359, 7
    %v361 = vsub.s32 0, %v360
    %v362 = vrot.slane %v323, %v361
    %v363 = vadd.f32 %v357, %v362
    %v364 = vadd.f32 %v358, %v362
    %v365 = vlaneseq
    %v366 = vshrl.u32 %v365, 7
    %v367 = vsub.s32 0, %v366
    %v368 = vrot.slane %v324, %v367
    %v370 = vsel %vm89, %v363, 0
    %v373 = vsel %vm89, %v364, 0
    %375 = vmatprep.subr.mxu0 0.0
    %376 = vmatpush1.msra.mxu0 %v310
    %377 = vmatprep.subr.mxu0 0.0
    %378 = vmatpush1.msra.mxu0 %v311
    %379 = vmatprep.subr.mxu0 0.0
    %380 = vmatpush1.msra.mxu0 %v312
    %381 = vmatprep.subr.mxu0 0.0
    %382 = vmatpush1.msra.mxu0 %v313
    %383 = vmatprep.subr.mxu0 0.0
    %384 = vmatpush1.msra.mxu0 0.0
    %385 = vmatprep.subr.mxu0 0.0
    %386 = vmatpush1.msra.mxu0 0.0
    %387 = vmatprep.subr.mxu0 0.0
    %388 = vmatpush1.msra.mxu0 0.0
    %389 = vmatprep.subr.mxu0 0.0
    %390 = vmatpush1.msra.mxu0 0.0
    %391 = vmatprep.subr.mxu0 0.0
    %392 = vmatpush1.msra.mxu0 0.0
    %393 = vmatprep.subr.mxu0 0.0
    %394 = vmatpush1.msra.mxu0 0.0
    %395 = vmatprep.subr.mxu0 0.0
    %396 = vmatpush1.msra.mxu0 0.0
    %397 = vmatprep.subr.mxu0 0.0
    %398 = vmatpush1.msra.mxu0 0.0
    %399 = vmatprep.subr.mxu0 0.0
    %400 = vmatpush1.msra.mxu0 0.0
    %401 = vmatprep.subr.mxu0 0.0
    %402 = vmatpush1.msra.mxu0 0.0
    %403 = vmatprep.subr.mxu0 0.0
    %404 = vmatpush1.msra.mxu0 0.0
    %405 = vmatprep.subr.mxu0 0.0
    %406 = vmatpush1.msra.mxu0 0.0
    %407 = vmatprep.subr.mxu0 0.0
    %408 = vmatpush1.msra.mxu0 0.0
    %409 = vmatprep.subr.mxu0 0.0
    %410 = vmatpush1.msra.mxu0 0.0
    %411 = vmatprep.subr.mxu0 0.0
    %412 = vmatpush1.msra.mxu0 0.0
    %413 = vmatprep.subr.mxu0 0.0
    %414 = vmatpush1.msra.mxu0 0.0
    %415 = vmatprep.subr.mxu0 0.0
    %416 = vmatpush1.msra.mxu0 0.0
    %417 = vmatprep.subr.mxu0 0.0
    %418 = vmatpush1.msra.mxu0 0.0
    %419 = vmatprep.subr.mxu0 0.0
    %420 = vmatpush1.msra.mxu0 0.0
    %421 = vmatprep.subr.mxu0 0.0
    %422 = vmatpush1.msra.mxu0 0.0
    %423 = vmatprep.subr.mxu0 0.0
    %424 = vmatpush1.msra.mxu0 0.0
    %425 = vmatprep.subr.mxu0 0.0
    %426 = vmatpush1.msra.mxu0 0.0
    %427 = vmatprep.subr.mxu0 0.0
    %428 = vmatpush1.msra.mxu0 0.0
    %429 = vmatprep.subr.mxu0 0.0
    %430 = vmatpush1.msra.mxu0 0.0
    %431 = vmatprep.subr.mxu0 0.0
    %432 = vmatpush1.msra.mxu0 0.0
    %433 = vmatprep.subr.mxu0 0.0
    %434 = vmatpush1.msra.mxu0 0.0
    %435 = vmatprep.subr.mxu0 0.0
    %436 = vmatpush1.msra.mxu0 0.0
    %437 = vmatprep.subr.mxu0 0.0
    %438 = vmatpush1.msra.mxu0 0.0
    %439 = vmatprep.mubr.f32.mxu0 0.0
    %440 = vmatmul.mubr.f32.gmra.mrb[0].mxu0 %v370
    %v441 = vpop.f32.mrb[0].mxu0
    %v442 = vadd.f32 %v368, %v441
    %v443 = vpop.f32.mrb[0].mxu0
    %444 = vmatprep.mubr.f32.mxu0 0.0
    %445 = vmatmul.mubr.f32.gmra.mrb[0].mxu0 %v373
    %v446 = vpop.f32.mrb[0].mxu0
    %v447 = vadd.f32 %v368, %v446
    %v448 = vpop.f32.mrb[0].mxu0
    %449 = vdwg.mxu0
    %v450 = vmax.f32 %v442, 0.0
    %v451 = vmax.f32 %v447, 0.0
    %v452 = vlaneseq
    %v453 = vshrl.u32 %v452, 7
    %v454 = vsub.s32 0, %v453
    %v455 = vrot.slane %v325, %v454
    %v457 = vsel %vm220, %v450, 0
    %v460 = vsel %vm220, %v451, 0
    %462 = vmatprep.subr.mxu0 0.0
    %463 = vmatpush1.msra.mxu0 %v314
    %464 = vmatprep.subr.mxu0 0.0
    %465 = vmatpush1.msra.mxu0 %v315
    %466 = vmatprep.subr.mxu0 0.0
    %467 = vmatpush1.msra.mxu0 %v316
    %468 = vmatprep.subr.mxu0 0.0
    %469 = vmatpush1.msra.mxu0 %v317
    %470 = vmatprep.subr.mxu0 0.0
    %471 = vmatpush1.msra.mxu0 %v318
    %472 = vmatprep.subr.mxu0 0.0
    %473 = vmatpush1.msra.mxu0 %v319
    %474 = vmatprep.subr.mxu0 0.0
    %475 = vmatpush1.msra.mxu0 %v320
    %476 = vmatprep.subr.mxu0 0.0
    %477 = vmatpush1.msra.mxu0 %v321
    %478 = vmatprep.subr.mxu0 0.0
    %479 = vmatpush1.msra.mxu0 0.0
    %480 = vmatprep.subr.mxu0 0.0
    %481 = vmatpush1.msra.mxu0 0.0
    %482 = vmatprep.subr.mxu0 0.0
    %483 = vmatpush1.msra.mxu0 0.0
    %484 = vmatprep.subr.mxu0 0.0
    %485 = vmatpush1.msra.mxu0 0.0
    %486 = vmatprep.subr.mxu0 0.0
    %487 = vmatpush1.msra.mxu0 0.0
    %488 = vmatprep.subr.mxu0 0.0
    %489 = vmatpush1.msra.mxu0 0.0
    %490 = vmatprep.subr.mxu0 0.0
    %491 = vmatpush1.msra.mxu0 0.0
    %492 = vmatprep.subr.mxu0 0.0
    %493 = vmatpush1.msra.mxu0 0.0
    %494 = vmatprep.subr.mxu0 0.0
    %495 = vmatpush1.msra.mxu0 0.0
    %496 = vmatprep.subr.mxu0 0.0
    %497 = vmatpush1.msra.mxu0 0.0
    %498 = vmatprep.subr.mxu0 0.0
    %499 = vmatpush1.msra.mxu0 0.0
    %500 = vmatprep.subr.mxu0 0.0
    %501 = vmatpush1.msra.mxu0 0.0
    %502 = vmatprep.subr.mxu0 0.0
    %503 = vmatpush1.msra.mxu0 0.0
    %504 = vmatprep.subr.mxu0 0.0
    %505 = vmatpush1.msra.mxu0 0.0
    %506 = vmatprep.subr.mxu0 0.0
    %507 = vmatpush1.msra.mxu0 0.0
    %508 = vmatprep.subr.mxu0 0.0
    %509 = vmatpush1.msra.mxu0 0.0
    %510 = vmatprep.subr.mxu0 0.0
    %511 = vmatpush1.msra.mxu0 0.0
    %512 = vmatprep.subr.mxu0 0.0
    %513 = vmatpush1.msra.mxu0 0.0
    %514 = vmatprep.subr.mxu0 0.0
    %515 = vmatpush1.msra.mxu0 0.0
    %516 = vmatprep.subr.mxu0 0.0
    %517 = vmatpush1.msra.mxu0 0.0
    %518 = vmatprep.subr.mxu0 0.0
    %519 = vmatpush1.msra.mxu0 0.0
    %520 = vmatprep.subr.mxu0 0.0
    %521 = vmatpush1.msra.mxu0 0.0
    %522 = vmatprep.subr.mxu0 0.0
    %523 = vmatpush1.msra.mxu0 0.0
    %524 = vmatprep.subr.mxu0 0.0
    %525 = vmatpush1.msra.mxu0 0.0
    %526 = vmatprep.mubr.f32.mxu0 0.0
    %527 = vmatmul.mubr.f32.gmra.mrb[0].mxu0 %v457
    %v528 = vpop.f32.mrb[0].mxu0
    %v529 = vadd.f32 %v455, %v528
    %v530 = vpop.f32.mrb[0].mxu0
    %531 = vmatprep.mubr.f32.mxu0 0.0
    %532 = vmatmul.mubr.f32.gmra.mrb[0].mxu0 %v460
    %v533 = vpop.f32.mrb[0].mxu0
    %v534 = vadd.f32 %v455, %v533
    %v535 = vpop.f32.mrb[0].mxu0
    %536 = vdwg.mxu0
    %v537 = vlaneseq
    %v538 = vshrl.u32 %v537, 7
    %v539 = vsub.s32 0, %v538
    %v540 = vrot.slane %v326, %v539
    %v541 = vmul.f32 %v529, %v540
    %v542 = vmul.f32 %v534, %v540
    %v543 = vadd.f32 %v308, %v541
    %v544 = vadd.f32 %v309, %v542
    %v545 = vld [vmem:[%s1 + $0xc0] sm:$0xff]
    %v546 = vld [vmem:[%s1 + $0xc8] sm:$0xff]
    %v547 = vld [vmem:[%s1 + $0xd0] sm:$0xff]
    %v548 = vld [vmem:[%s1 + $0xd8] sm:$0xff]
    %v549 = vld [vmem:[%s1 + $0xe0] sm:$0xff]
    %v550 = vld [vmem:[%s1 + $0xe8] sm:$0xff]
    %v551 = vld [vmem:[%s1 + $0xf0] sm:$0xff]
    %v552 = vld [vmem:[%s1 + $0xf8] sm:$0xff]
    %v553 = vld [vmem:[%s1 + $0x100] sm:$0xff]
    %v554 = vld [vmem:[%s1 + $0x108] sm:$0xff]
    %v555 = vld [vmem:[%s1 + $0x110] sm:$0xff]
    %v556 = vld [vmem:[%s1 + $0x118] sm:$0xff]
    %v557 = vld [vmem:[%s1 + $0x138] sm:$0x1]
    %v558 = vld [vmem:[%s1 + $0x139] sm:$0x1]
    %v559 = vld [vmem:[%s1 + $0x13a] sm:$0x1]
    %v560 = vld [vmem:[%s1 + $0x13b] sm:$0x1]
    %v561 = vld [vmem:[%s1 + $0x13c] sm:$0x1]
    %v562 = vsel %vm89, %v543, 0.0
    %563 = vadd.xlane.f32.xlu0 %v562
    %v564 = vpop.xlane.xlu0 %563
    %v565 = vsel %vm89, %v544, 0.0
    %566 = vadd.xlane.f32.xlu0 %v565
    %v567 = vpop.xlane.xlu0 %566
    %v568 = vmul.f32 %v564, %v96
    %v569 = vmul.f32 %v567, %v96
    %v570 = vsub.f32 %v543, %v568
    %v571 = vsub.f32 %v544, %v569
    %v572 = vmul.f32 %v570, %v570
    %v573 = vmul.f32 %v571, %v571
    %v574 = vsel %vm89, %v572, 0.0
    %575 = vadd.xlane.f32.xlu0 %v574
    %v576 = vpop.xlane.xlu0 %575
    %v577 = vsel %vm89, %v573, 0.0
    %578 = vadd.xlane.f32.xlu0 %v577
    %v579 = vpop.xlane.xlu0 %578
    %v580 = vmul.f32 %v576, %v96
    %v581 = vmul.f32 %v579, %v96
    %v582 = vadd.f32 %v580, 1e-05
    %v583 = vadd.f32 %v581, 1e-05
    %v584 = vrsqrt.pop %v582
    %v585 = vrsqrt.pop %v583
    %v586 = vmul.f32 %v570, %v584
    %v587 = vmul.f32 %v571, %v585
    %v588 = vlaneseq
    %v589 = vshrl.u32 %v588, 7
    %v590 = vsub.s32 0, %v589
    %v591 = vrot.slane %v557, %v590
    %v592 = vmul.f32 %v586, %v591
    %v593 = vmul.f32 %v587, %v591
    %v594 = vlaneseq
    %v595 = vshrl.u32 %v594, 7
    %v596 = vsub.s32 0, %v595
    %v597 = vrot.slane %v558, %v596
    %v598 = vadd.f32 %v592, %v597
    %v599 = vadd.f32 %v593, %v597
    %v600 = vlaneseq
    %v601 = vshrl.u32 %v600, 7
    %v602 = vsub.s32 0, %v601
    %v603 = vrot.slane %v559, %v602
    %v605 = vsel %vm89, %v598, 0
    %v608 = vsel %vm89, %v599, 0
    %610 = vmatprep.subr.mxu0 0.0
    %611 = vmatpush1.msra.mxu0 %v545
    %612 = vmatprep.subr.mxu0 0.0
    %613 = vmatpush1.msra.mxu0 %v546
    %614 = vmatprep.subr.mxu0 0.0
    %615 = vmatpush1.msra.mxu0 %v547
    %616 = vmatprep.subr.mxu0 0.0
    %617 = vmatpush1.msra.mxu0 %v548
    %618 = vmatprep.subr.mxu0 0.0
    %619 = vmatpush1.msra.mxu0 0.0
    %620 = vmatprep.subr.mxu0 0.0
    %621 = vmatpush1.msra.mxu0 0.0
    %622 = vmatprep.subr.mxu0 0.0
    %623 = vmatpush1.msra.mxu0 0.0
    %624 = vmatprep.subr.mxu0 0.0
    %625 = vmatpush1.msra.mxu0 0.0
    %626 = vmatprep.subr.mxu0 0.0
    %627 = vmatpush1.msra.mxu0 0.0
    %628 = vmatprep.subr.mxu0 0.0
    %629 = vmatpush1.msra.mxu0 0.0
    %630 = vmatprep.subr.mxu0 0.0
    %631 = vmatpush1.msra.mxu0 0.0
    %632 = vmatprep.subr.mxu0 0.0
    %633 = vmatpush1.msra.mxu0 0.0
    %634 = vmatprep.subr.mxu0 0.0
    %635 = vmatpush1.msra.mxu0 0.0
    %636 = vmatprep.subr.mxu0 0.0
    %637 = vmatpush1.msra.mxu0 0.0
    %638 = vmatprep.subr.mxu0 0.0
    %639 = vmatpush1.msra.mxu0 0.0
    %640 = vmatprep.subr.mxu0 0.0
    %641 = vmatpush1.msra.mxu0 0.0
    %642 = vmatprep.subr.mxu0 0.0
    %643 = vmatpush1.msra.mxu0 0.0
    %644 = vmatprep.subr.mxu0 0.0
    %645 = vmatpush1.msra.mxu0 0.0
    %646 = vmatprep.subr.mxu0 0.0
    %647 = vmatpush1.msra.mxu0 0.0
    %648 = vmatprep.subr.mxu0 0.0
    %649 = vmatpush1.msra.mxu0 0.0
    %650 = vmatprep.subr.mxu0 0.0
    %651 = vmatpush1.msra.mxu0 0.0
    %652 = vmatprep.subr.mxu0 0.0
    %653 = vmatpush1.msra.mxu0 0.0
    %654 = vmatprep.subr.mxu0 0.0
    %655 = vmatpush1.msra.mxu0 0.0
    %656 = vmatprep.subr.mxu0 0.0
    %657 = vmatpush1.msra.mxu0 0.0
    %658 = vmatprep.subr.mxu0 0.0
    %659 = vmatpush1.msra.mxu0 0.0
    %660 = vmatprep.subr.mxu0 0.0
    %661 = vmatpush1.msra.mxu0 0.0
    %662 = vmatprep.subr.mxu0 0.0
    %663 = vmatpush1.msra.mxu0 0.0
    %664 = vmatprep.subr.mxu0 0.0
    %665 = vmatpush1.msra.mxu0 0.0
    %666 = vmatprep.subr.mxu0 0.0
    %667 = vmatpush1.msra.mxu0 0.0
    %668 = vmatprep.subr.mxu0 0.0
    %669 = vmatpush1.msra.mxu0 0.0
    %670 = vmatprep.subr.mxu0 0.0
    %671 = vmatpush1.msra.mxu0 0.0
    %672 = vmatprep.subr.mxu0 0.0
    %673 = vmatpush1.msra.mxu0 0.0
    %674 = vmatprep.mubr.f32.mxu0 0.0
    %675 = vmatmul.mubr.f32.gmra.mrb[0].mxu0 %v605
    %v676 = vpop.f32.mrb[0].mxu0
    %v677 = vadd.f32 %v603, %v676
    %v678 = vpop.f32.mrb[0].mxu0
    %679 = vmatprep.mubr.f32.mxu0 0.0
    %680 = vmatmul.mubr.f32.gmra.mrb[0].mxu0 %v608
    %v681 = vpop.f32.mrb[0].mxu0
    %v682 = vadd.f32 %v603, %v681
    %v683 = vpop.f32.mrb[0].mxu0
    %684 = vdwg.mxu0
    %v685 = vmax.f32 %v677, 0.0
    %v686 = vmax.f32 %v682, 0.0
    %v687 = vlaneseq
    %v688 = vshrl.u32 %v687, 7
    %v689 = vsub.s32 0, %v688
    %v690 = vrot.slane %v560, %v689
    %v692 = vsel %vm220, %v685, 0
    %v695 = vsel %vm220, %v686, 0
    %697 = vmatprep.subr.mxu0 0.0
    %698 = vmatpush1.msra.mxu0 %v549
    %699 = vmatprep.subr.mxu0 0.0
    %700 = vmatpush1.msra.mxu0 %v550
    %701 = vmatprep.subr.mxu0 0.0
    %702 = vmatpush1.msra.mxu0 %v551
    %703 = vmatprep.subr.mxu0 0.0
    %704 = vmatpush1.msra.mxu0 %v552
    %705 = vmatprep.subr.mxu0 0.0
    %706 = vmatpush1.msra.mxu0 %v553
    %707 = vmatprep.subr.mxu0 0.0
    %708 = vmatpush1.msra.mxu0 %v554
    %709 = vmatprep.subr.mxu0 0.0
    %710 = vmatpush1.msra.mxu0 %v555
    %711 = vmatprep.subr.mxu0 0.0
    %712 = vmatpush1.msra.mxu0 %v556
    %713 = vmatprep.subr.mxu0 0.0
    %714 = vmatpush1.msra.mxu0 0.0
    %715 = vmatprep.subr.mxu0 0.0
    %716 = vmatpush1.msra.mxu0 0.0
    %717 = vmatprep.subr.mxu0 0.0
    %718 = vmatpush1.msra.mxu0 0.0
    %719 = vmatprep.subr.mxu0 0.0
    %720 = vmatpush1.msra.mxu0 0.0
    %721 = vmatprep.subr.mxu0 0.0
    %722 = vmatpush1.msra.mxu0 0.0
    %723 = vmatprep.subr.mxu0 0.0
    %724 = vmatpush1.msra.mxu0 0.0
    %725 = vmatprep.subr.mxu0 0.0
    %726 = vmatpush1.msra.mxu0 0.0
    %727 = vmatprep.subr.mxu0 0.0
    %728 = vmatpush1.msra.mxu0 0.0
    %729 = vmatprep.subr.mxu0 0.0
    %730 = vmatpush1.msra.mxu0 0.0
    %731 = vmatprep.subr.mxu0 0.0
    %732 = vmatpush1.msra.mxu0 0.0
    %733 = vmatprep.subr.mxu0 0.0
    %734 = vmatpush1.msra.mxu0 0.0
    %735 = vmatprep.subr.mxu0 0.0
    %736 = vmatpush1.msra.mxu0 0.0
    %737 = vmatprep.subr.mxu0 0.0
    %738 = vmatpush1.msra.mxu0 0.0
    %739 = vmatprep.subr.mxu0 0.0
    %740 = vmatpush1.msra.mxu0 0.0
    %741 = vmatprep.subr.mxu0 0.0
    %742 = vmatpush1.msra.mxu0 0.0
    %743 = vmatprep.subr.mxu0 0.0
    %744 = vmatpush1.msra.mxu0 0.0
    %745 = vmatprep.subr.mxu0 0.0
    %746 = vmatpush1.msra.mxu0 0.0
    %747 = vmatprep.subr.mxu0 0.0
    %748 = vmatpush1.msra.mxu0 0.0
    %749 = vmatprep.subr.mxu0 0.0
    %750 = vmatpush1.msra.mxu0 0.0
    %751 = vmatprep.subr.mxu0 0.0
    %752 = vmatpush1.msra.mxu0 0.0
    %753 = vmatprep.subr.mxu0 0.0
    %754 = vmatpush1.msra.mxu0 0.0
    %755 = vmatprep.subr.mxu0 0.0
    %756 = vmatpush1.msra.mxu0 0.0
    %757 = vmatprep.subr.mxu0 0.0
    %758 = vmatpush1.msra.mxu0 0.0
    %759 = vmatprep.subr.mxu0 0.0
    %760 = vmatpush1.msra.mxu0 0.0
    %761 = vmatprep.mubr.f32.mxu0 0.0
    %762 = vmatmul.mubr.f32.gmra.mrb[0].mxu0 %v692
    %v763 = vpop.f32.mrb[0].mxu0
    %v764 = vadd.f32 %v690, %v763
    %v765 = vpop.f32.mrb[0].mxu0
    %766 = vmatprep.mubr.f32.mxu0 0.0
    %767 = vmatmul.mubr.f32.gmra.mrb[0].mxu0 %v695
    %v768 = vpop.f32.mrb[0].mxu0
    %v769 = vadd.f32 %v690, %v768
    %v770 = vpop.f32.mrb[0].mxu0
    %771 = vdwg.mxu0
    %v772 = vlaneseq
    %v773 = vshrl.u32 %v772, 7
    %v774 = vsub.s32 0, %v773
    %v775 = vrot.slane %v561, %v774
    %v776 = vmul.f32 %v764, %v775
    %v777 = vmul.f32 %v769, %v775
    %v778 = vadd.f32 %v543, %v776
    %v779 = vadd.f32 %v544, %v777
    %780 = vst.msk [vmem:[#allocation2] sm:$0xff] %vm89, %v778
    %781 = vst.msk [vmem:[#allocation2 + $0x8] sm:$0xff] %vm89, %v779
    // Predicated region
    $region10: #{tpu_custom_call.1} parent=1 // pred_check
      _
    $region11: #{tpu_custom_call.1} parent=1 // pred_check_branch
      %783 = sbr.rel (0) target = $region13
    $region12: #{tpu_custom_call.1} parent=1 // pred_region
      %s785 = ssub.s32 256, 256
      %786 = vsyncadd [#allocation3], %s785
      %s787 = sshll.u32 [#allocation2], 4
      %s788 = int_to_ptr.vmem [resolvable:$true] %s787
      %793 = dma.vmem_to_hbm [thread:$0]  %s788, 256, %s2, [#allocation3], 128, 128, 8
    $region13: #{tpu_custom_call.1} parent=1 // pred_fallthru
      _
    // Predicated region
    $region14: #{tpu_custom_call.1} parent=1 // pred_check
      _
    $region15: #{tpu_custom_call.1} parent=1 // pred_check_branch
      %795 = sbr.rel (0) target = $region17
    $region16: #{tpu_custom_call.1} parent=1 // pred_region
      %796 = dma.done [#allocation3], 256
    $region17: #{tpu_custom_call.1} parent=1 // pred_fallthru
      _
    %797 = vsyncpa [#allocation3], 1

</llo_original>
